<compile_context>
chip_gen: v6e
topology: v6e:2x2x1
jax: 0.10.0
libtpu: 0.0.40
codegen_flags: <defaults>
</compile_context>

<pallas_src>
import functools

import jax
import jax.numpy as jnp
from jax.experimental import pallas as pl
from jax.experimental.pallas import tpu as pltpu

LANE = 128
_VMEM_LIMIT = 32 * 1024 * 1024  # safe on v5e/v6e (128 MiB) and v7x (64 MiB)


def _round_up(x, m):
    return ((x + m - 1) // m) * m


# ----------------------------- Pallas kernels ------------------------------

def _conv_relu_bn_kernel(x_ref, w_ref, b_ref, g_ref, beta_ref, o_ref, *, eps):
    """One fused conv layer epilogue for a channel slice:
       o = BN(ReLU(x @ w + b)) with batch statistics over all M rows.
       x is bf16, accumulation + epilogue are f32."""
    acc = jnp.dot(x_ref[...], w_ref[...], preferred_element_type=jnp.float32)
    acc = acc + b_ref[...]                       # (1, tn) broadcast, hoisted (no K-loop)
    acc = jnp.maximum(acc, 0.0)                  # ReLU
    # BatchNorm2d, training mode (biased variance).  Exact: this grid step owns
    # every row (pixel) of its output-channel slice.
    mean = jnp.mean(acc, axis=0, keepdims=True)
    var = jnp.mean((acc - mean) ** 2, axis=0, keepdims=True)
    inv = jax.lax.rsqrt(var + eps)
    o_ref[...] = ((acc - mean) * inv * g_ref[...] + beta_ref[...]).astype(o_ref.dtype)


def conv_relu_bn(patches, w, b, gamma, beta, *, eps=1e-5, tn=LANE):
    """patches: (M, K) bf16, w: (K, Cp) bf16, b/gamma/beta: (1, Cp) f32 -> (M, Cp) f32."""
    M, K = patches.shape
    _, Cp = w.shape
    grid = (pl.cdiv(Cp, tn),)
    return pl.pallas_call(
        functools.partial(_conv_relu_bn_kernel, eps=eps),
        out_shape=jax.ShapeDtypeStruct((M, Cp), jnp.float32),
        grid=grid,
        in_specs=[
            pl.BlockSpec((M, K), lambda j: (0, 0)),     # patches resident across channel tiles
            pl.BlockSpec((K, tn), lambda j: (0, j)),
            pl.BlockSpec((1, tn), lambda j: (0, j)),
            pl.BlockSpec((1, tn), lambda j: (0, j)),
            pl.BlockSpec((1, tn), lambda j: (0, j)),
        ],
        out_specs=pl.BlockSpec((M, tn), lambda j: (0, j)),
        compiler_params=pltpu.CompilerParams(
            dimension_semantics=("parallel",),
            vmem_limit_bytes=_VMEM_LIMIT,
        ),
    )(patches, w, b, gamma, beta)


def _linear_kernel(x_ref, w_ref, b_ref, o_ref):
    acc = jnp.dot(x_ref[...], w_ref[...], preferred_element_type=jnp.float32)
    o_ref[...] = (acc + b_ref[...]).astype(o_ref.dtype)


def linear(x, w, b, *, tn=LANE):
    """x: (M, K) bf16, w: (K, Np) bf16, b: (1, Np) f32 -> (M, Np) f32."""
    M, K = x.shape
    _, Np = w.shape
    return pl.pallas_call(
        _linear_kernel,
        out_shape=jax.ShapeDtypeStruct((M, Np), jnp.float32),
        grid=(pl.cdiv(Np, tn),),
        in_specs=[
            pl.BlockSpec((M, K), lambda j: (0, 0)),
            pl.BlockSpec((K, tn), lambda j: (0, j)),
            pl.BlockSpec((1, tn), lambda j: (0, j)),
        ],
        out_specs=pl.BlockSpec((M, tn), lambda j: (0, j)),
        compiler_params=pltpu.CompilerParams(
            dimension_semantics=("parallel",),
            vmem_limit_bytes=_VMEM_LIMIT,
        ),
    )(x, w, b)


# ------------------------------- glue (JAX) --------------------------------

def im2col_nhwc(x, k, s, p):
    """x: (N, H, W, C) NHWC -> patches (N*Ho*Wo, k*k*C) with (kh, kw, C) feature order."""
    N, H, W, C = x.shape
    xp = jnp.pad(x, ((0, 0), (p, p), (p, p), (0, 0)))
    Ho = (H + 2 * p - k) // s + 1
    Wo = (W + 2 * p - k) // s + 1
    slabs = []
    for di in range(k):
        for dj in range(k):
            slabs.append(xp[:, di:di + s * Ho:s, dj:dj + s * Wo:s, :])   # (N, Ho, Wo, C)
    pat = jnp.concatenate(slabs, axis=-1)                                # (N, Ho, Wo, k*k*C)
    return pat.reshape(N * Ho * Wo, k * k * C), N, Ho, Wo


def init_params(key, input_channels, input_shape, hidden_channels,
                kernel_sizes, strides, paddings, latent_dim):
    """Deterministic synthetic parameters, reshaped/padded for the TPU kernels."""
    params = {"conv": [], "latent_dim": latent_dim}
    in_c = input_channels
    h, w = input_shape
    for out_c, k, s, p in zip(hidden_channels, kernel_sizes, strides, paddings):
        key, kw, kb = jax.random.split(key, 3)
        fan_in = in_c * k * k
        w_conv = jax.random.normal(kw, (out_c, in_c, k, k), jnp.float32) * (2.0 / fan_in) ** 0.5
        b_conv = jax.random.normal(kb, (out_c,), jnp.float32) * 0.01
        c_pad = _round_up(out_c, LANE)
        # (C_out, C_in, kh, kw) -> (kh, kw, C_in, C_out) to match the NHWC
        # im2col feature ordering; zero-pad C_out to a lane-dense width.
        w2d = w_conv.transpose(2, 3, 1, 0).reshape(k * k * in_c, out_c)
        params["conv"].append({
            "w": jnp.pad(w2d, ((0, 0), (0, c_pad - out_c))).astype(jnp.bfloat16),
            "b": jnp.pad(b_conv.reshape(1, out_c), ((0, 0), (0, c_pad - out_c))),
            "gamma": jnp.pad(jnp.ones((1, out_c), jnp.float32),
                             ((0, 0), (0, c_pad - out_c)), constant_values=1.0),
            "beta": jnp.zeros((1, c_pad), jnp.float32),
            "c_out": out_c,
        })
        in_c = out_c
        h = (h + 2 * p - k) // s + 1
        w = (w + 2 * p - k) // s + 1
    flattened = in_c * h * w

    # fc_mean / fc_logvar fused into one (flattened, 2*latent) matmul.
    ws, bs = [], []
    for _name in ("fc_mean", "fc_logvar"):
        key, kwt, kbt = jax.random.split(key, 3)
        w_fc = jax.random.normal(kwt, (latent_dim, flattened), jnp.float32) * (1.0 / flattened) ** 0.5
        b_fc = jax.random.normal(kbt, (latent_dim,), jnp.float32) * 0.01
        # PyTorch Flatten runs over NCHW (C, H, W); our activations are NHWC,
        # so permute the weight rows once to (H, W, C) order.
        w_nhwc = (w_fc.reshape(latent_dim, in_c, h, w)
                  .transpose(2, 3, 1, 0)
                  .reshape(flattened, latent_dim))
        ws.append(w_nhwc)
        bs.append(b_fc)
    w_cat = jnp.concatenate(ws, axis=1)                  # (flattened, 2*latent)
    b_cat = jnp.concatenate(bs).reshape(1, -1)           # (1, 2*latent)
    n_pad = _round_up(2 * latent_dim, LANE)
    params["fc"] = {
        "w": jnp.pad(w_cat, ((0, 0), (0, n_pad - 2 * latent_dim))).astype(jnp.bfloat16),
        "b": jnp.pad(b_cat, ((0, 0), (0, n_pad - 2 * latent_dim))),
    }
    return params


def conv_encoder_forward(params, x, kernel_sizes, strides, paddings):
    """x: (N, C, H, W) NCHW float32 -> (mu, logvar), each (N, latent_dim)."""
    h = jnp.transpose(x, (0, 2, 3, 1))                   # NCHW -> NHWC once
    for layer, (k, s, p) in zip(params["conv"], zip(kernel_sizes, strides, paddings)):
        patches, n, ho, wo = im2col_nhwc(h, k, s, p)
        y = conv_relu_bn(patches.astype(jnp.bfloat16),   # bf16 MXU operands
                         layer["w"], layer["b"], layer["gamma"], layer["beta"])
        c_out = layer["c_out"]
        h = y[:, :c_out].reshape(n, ho, wo, c_out)       # stay NHWC, drop lane padding
    flat = h.reshape(h.shape[0], -1)                     # NHWC flatten (weights pre-permuted)
    out = linear(flat.astype(jnp.bfloat16), params["fc"]["w"], params["fc"]["b"])
    ld = params["latent_dim"]
    mu, logvar = out[:, :ld], out[:, ld:2 * ld]
    return mu, logvar


# --------------------------------- main -------------------------------------

if __name__ == "__main__":
    # Small, forward-consistent configuration.
    batch = 2
    input_channels = 4
    input_shape = (16, 16)
    hidden_channels = [8, 16]
    kernel_sizes = [3, 3]
    strides = [2, 2]
    paddings = [1, 1]
    latent_dim = 32

    key = jax.random.PRNGKey(0)
    kx, kp = jax.random.split(key)
    x = jax.random.normal(kx, (batch, input_channels) + input_shape, jnp.float32)

    params = init_params(kp, input_channels, input_shape, hidden_channels,
                         kernel_sizes, strides, paddings, latent_dim)

    mu, logvar = conv_encoder_forward(params, x, kernel_sizes, strides, paddings)
    jax.block_until_ready((mu, logvar))

    assert mu.shape == (batch, latent_dim)
    assert logvar.shape == (batch, latent_dim)
    assert bool(jnp.all(jnp.isfinite(mu))) and bool(jnp.all(jnp.isfinite(logvar)))
    print("KERNEL_OK")
</pallas_src>

<mosaic_0001>
module attributes {stable_mosaic.version = 11 : i64} {
  func.func @_conv_relu_bn_kernel(%arg0: i32, %arg1: memref<128x36xbf16, #tpu.memory_space<vmem>>, %arg2: memref<36x128xbf16, #tpu.memory_space<vmem>>, %arg3: memref<1x128xf32, #tpu.memory_space<vmem>>, %arg4: memref<1x128xf32, #tpu.memory_space<vmem>>, %arg5: memref<1x128xf32, #tpu.memory_space<vmem>>, %arg6: memref<128x128xf32, #tpu.memory_space<vmem>>) attributes {dimension_semantics = [#tpu.dimension_semantics<parallel>], iteration_bounds = array<i64: 1>, scalar_prefetch = 0 : i64, scratch_operands = 0 : i64, tpu.core_type = #tpu.core_type<tc>, window_params = [{pipeline_mode = #tpu.pipeline_mode<synchronous>, transform_indices = @transform_0, window_bounds = array<i64: 128, 36>}, {transform_indices = @transform_1, window_bounds = array<i64: 36, 128>}, {transform_indices = @transform_2, window_bounds = array<i64: 1, 128>}, {transform_indices = @transform_3, window_bounds = array<i64: 1, 128>}, {transform_indices = @transform_4, window_bounds = array<i64: 1, 128>}, {transform_indices = @transform_5, window_bounds = array<i64: 128, 128>}]} {
    %c0 = arith.constant 0 : index
    %c0_0 = arith.constant 0 : index
    %0 = vector.load %arg1[%c0, %c0_0] : memref<128x36xbf16, #tpu.memory_space<vmem>>, vector<128x36xbf16>
    %c0_1 = arith.constant 0 : index
    %c0_2 = arith.constant 0 : index
    %1 = vector.load %arg2[%c0_1, %c0_2] : memref<36x128xbf16, #tpu.memory_space<vmem>>, vector<36x128xbf16>
    %cst = arith.constant dense<0.000000e+00> : vector<128x128xf32>
    %2 = tpu.matmul %0, %1, %cst {dimension_numbers = #tpu.dot_dimension_numbers<[1], [0], [0], [1], [0, 0, 1, 1], [], []>} : vector<128x36xbf16>, vector<36x128xbf16>, vector<128x128xf32> -> vector<128x128xf32>
    %c0_3 = arith.constant 0 : index
    %c0_4 = arith.constant 0 : index
    %3 = vector.load %arg3[%c0_3, %c0_4] : memref<1x128xf32, #tpu.memory_space<vmem>>, vector<1x128xf32>
    %4 = vector.broadcast %3 : vector<1x128xf32> to vector<128x128xf32>
    %5 = arith.addf %2, %4 : vector<128x128xf32>
    %cst_5 = arith.constant 0.000000e+00 : f32
    %6 = vector.broadcast %cst_5 : f32 to vector<128x128xf32>
    %7 = arith.maximumf %5, %6 : vector<128x128xf32>
    %cst_6 = arith.constant dense<0.000000e+00> : vector<128xf32>
    %8 = vector.multi_reduction <add>, %7, %cst_6 [0] : vector<128x128xf32> to vector<128xf32>
    %9 = vector.shape_cast %8 : vector<128xf32> to vector<1x128xf32>
    %cst_7 = arith.constant 1.280000e+02 : f32
    %10 = vector.broadcast %cst_7 : f32 to vector<1x128xf32>
    %11 = arith.divf %9, %10 : vector<1x128xf32>
    %12 = vector.broadcast %11 : vector<1x128xf32> to vector<128x128xf32>
    %13 = arith.subf %7, %12 : vector<128x128xf32>
    %14 = arith.mulf %13, %13 : vector<128x128xf32>
    %cst_8 = arith.constant dense<0.000000e+00> : vector<128xf32>
    %15 = vector.multi_reduction <add>, %14, %cst_8 [0] : vector<128x128xf32> to vector<128xf32>
    %16 = vector.shape_cast %15 : vector<128xf32> to vector<1x128xf32>
    %cst_9 = arith.constant 1.280000e+02 : f32
    %17 = vector.broadcast %cst_9 : f32 to vector<1x128xf32>
    %18 = arith.divf %16, %17 : vector<1x128xf32>
    %cst_10 = arith.constant 9.99999974E-6 : f32
    %19 = vector.broadcast %cst_10 : f32 to vector<1x128xf32>
    %20 = arith.addf %18, %19 : vector<1x128xf32>
    %21 = math.rsqrt %20 : vector<1x128xf32>
    %22 = vector.broadcast %11 : vector<1x128xf32> to vector<128x128xf32>
    %23 = arith.subf %7, %22 : vector<128x128xf32>
    %24 = vector.broadcast %21 : vector<1x128xf32> to vector<128x128xf32>
    %25 = arith.mulf %23, %24 : vector<128x128xf32>
    %c0_11 = arith.constant 0 : index
    %c0_12 = arith.constant 0 : index
    %26 = vector.load %arg4[%c0_11, %c0_12] : memref<1x128xf32, #tpu.memory_space<vmem>>, vector<1x128xf32>
    %27 = vector.broadcast %26 : vector<1x128xf32> to vector<128x128xf32>
    %28 = arith.mulf %25, %27 : vector<128x128xf32>
    %c0_13 = arith.constant 0 : index
    %c0_14 = arith.constant 0 : index
    %29 = vector.load %arg5[%c0_13, %c0_14] : memref<1x128xf32, #tpu.memory_space<vmem>>, vector<1x128xf32>
    %30 = vector.broadcast %29 : vector<1x128xf32> to vector<128x128xf32>
    %31 = arith.addf %28, %30 : vector<128x128xf32>
    %c0_15 = arith.constant 0 : index
    %c0_16 = arith.constant 0 : index
    %32 = vector.load %arg6[%c0_15, %c0_16] : memref<128x128xf32, #tpu.memory_space<vmem>>, vector<128x128xf32>
    tpu.vector_store %arg6[%c0_15, %c0_16], %31 {strides = array<i32>} : memref<128x128xf32, #tpu.memory_space<vmem>>, vector<128x128xf32>,
    return
  }
  func.func @transform_0(%arg0: i32) -> (i32, i32) {
    %c0_i32 = arith.constant 0 : i32
    %c0_i32_0 = arith.constant 0 : i32
    %c0_i32_1 = arith.constant 0 : i32
    return %c0_i32, %c0_i32_0 : i32, i32
  }
  func.func @transform_1(%arg0: i32) -> (i32, i32) {
    %c0_i32 = arith.constant 0 : i32
    %c0_i32_0 = arith.constant 0 : i32
    return %c0_i32, %arg0 : i32, i32
  }
  func.func @transform_2(%arg0: i32) -> (i32, i32) {
    %c0_i32 = arith.constant 0 : i32
    %c0_i32_0 = arith.constant 0 : i32
    return %c0_i32, %arg0 : i32, i32
  }
  func.func @transform_3(%arg0: i32) -> (i32, i32) {
    %c0_i32 = arith.constant 0 : i32
    %c0_i32_0 = arith.constant 0 : i32
    return %c0_i32, %arg0 : i32, i32
  }
  func.func @transform_4(%arg0: i32) -> (i32, i32) {
    %c0_i32 = arith.constant 0 : i32
    %c0_i32_0 = arith.constant 0 : i32
    return %c0_i32, %arg0 : i32, i32
  }
  func.func @transform_5(%arg0: i32) -> (i32, i32) {
    %c0_i32 = arith.constant 0 : i32
    %c0_i32_0 = arith.constant 0 : i32
    return %c0_i32, %arg0 : i32, i32
  }
}

</mosaic_0001>

<llo_original>
// kernel: tpu_custom_call.1
$region0: #{tpu_custom_call.1}
  #allocation0 [shape = 'u32[]', space=smem, size = 0x4, offset = 0x4, fixed_abs, tag = 'smem constant byte address 0x4 - core index']
  #allocation1 [shape = 'u32[144,128]{1,0:T(1,128)}', space=vmem, size = 0x12000, scoped, tag = 'internal scratch']
  %s0 = inlined_call_operand.vmem [shape: bf16[128,36], index: 0, kind: input, shape index: {}]
  %s1 = inlined_call_operand.vmem [shape: bf16[36,128], index: 1, kind: input, shape index: {}]
  %s2 = inlined_call_operand.vmem [shape: f32[1,128], index: 2, kind: input, shape index: {}]
  %s3 = inlined_call_operand.vmem [shape: f32[1,128], index: 3, kind: input, shape index: {}]
  %s4 = inlined_call_operand.vmem [shape: f32[1,128], index: 4, kind: input, shape index: {}]
  %s5 = inlined_call_operand.hbm [shape: f32[128,128], index: 5, kind: output, shape index: {}]
  %s6 = sld [smem:[#allocation0]]
  $region30: #{tpu_custom_call.1} parent=0
    _
  %s8 = ssub.s32 1, %s6
  %s9 = scalar_select 0, %s8, %s6
  $region1: #{tpu_custom_call.1} parent=0
    #allocation2 [shape = 'u8[65536]{0}', space=vmem, size = 0x10000, scoped, tag = 'output window, operand 0, single buffered']
    #allocation3 [shape = 's32[1]{0}', space=sflag, size = 0x4, scoped, tag = 'scoped memory for tpu_custom_call.1']
    %10 = vsyncpa [#allocation3], 0
    // Predicated region
    $region2: #{tpu_custom_call.1} parent=1 // pred_check
      _
    $region3: #{tpu_custom_call.1} parent=1 // pred_check_branch
      %12 = sbr.rel (0) target = $region5
    $region4: #{tpu_custom_call.1} parent=1 // pred_region
      _
    $region5: #{tpu_custom_call.1} parent=1 // pred_fallthru
      _
    // Predicated region
    $region6: #{tpu_custom_call.1} parent=1 // pred_check
      _
    $region7: #{tpu_custom_call.1} parent=1 // pred_check_branch
      %14 = sbr.rel (0) target = $region9
    $region8: #{tpu_custom_call.1} parent=1 // pred_region
      _
    $region9: #{tpu_custom_call.1} parent=1 // pred_fallthru
      _
    // Predicated region
    $region10: #{tpu_custom_call.1} parent=1 // pred_check
      _
    $region11: #{tpu_custom_call.1} parent=1 // pred_check_branch
      %16 = sbr.rel (0) target = $region13
    $region12: #{tpu_custom_call.1} parent=1 // pred_region
      _
    $region13: #{tpu_custom_call.1} parent=1 // pred_fallthru
      _
    // Predicated region
    $region14: #{tpu_custom_call.1} parent=1 // pred_check
      _
    $region15: #{tpu_custom_call.1} parent=1 // pred_check_branch
      %18 = sbr.rel (0) target = $region17
    $region16: #{tpu_custom_call.1} parent=1 // pred_region
      _
    $region17: #{tpu_custom_call.1} parent=1 // pred_fallthru
      _
    // Predicated region
    $region18: #{tpu_custom_call.1} parent=1 // pred_check
      _
    $region19: #{tpu_custom_call.1} parent=1 // pred_check_branch
      %20 = sbr.rel (0) target = $region21
    $region20: #{tpu_custom_call.1} parent=1 // pred_region
      _
    $region21: #{tpu_custom_call.1} parent=1 // pred_fallthru
      _
    %v22 = vld [vmem:[%s0] sm:$0xf]
    %v23 = vld [vmem:[%s0 + $0x4] sm:$0xf]
    %v24 = vld [vmem:[%s0 + $0x8] sm:$0xf]
    %v25 = vld [vmem:[%s0 + $0xc] sm:$0xf]
    %v26 = vld [vmem:[%s0 + $0x10] sm:$0xf]
    %v27 = vld [vmem:[%s0 + $0x14] sm:$0xf]
    %v28 = vld [vmem:[%s0 + $0x18] sm:$0xf]
    %v29 = vld [vmem:[%s0 + $0x1c] sm:$0xf]
    %v30 = vld [vmem:[%s0 + $0x20] sm:$0xf]
    %v31 = vld [vmem:[%s0 + $0x24] sm:$0xf]
    %v32 = vld [vmem:[%s0 + $0x28] sm:$0xf]
    %v33 = vld [vmem:[%s0 + $0x2c] sm:$0xf]
    %v34 = vld [vmem:[%s0 + $0x30] sm:$0xf]
    %v35 = vld [vmem:[%s0 + $0x34] sm:$0xf]
    %v36 = vld [vmem:[%s0 + $0x38] sm:$0xf]
    %v37 = vld [vmem:[%s0 + $0x3c] sm:$0xf]
    %v38 = vld [vmem:[%s1] sm:$0xf]
    %v39 = vld [vmem:[%s1 + $0x4] sm:$0xf]
    %v40 = vld [vmem:[%s1 + $0x8] sm:$0xf]
    %v41 = vld [vmem:[%s1 + $0xc] sm:$0xf]
    %v42 = vld [vmem:[%s1 + $0x10] sm:$0x3]
    %v43 = vld [vmem:[%s2] sm:$0x1]
    %v45 = vlaneseq
    %v46 = vshrl.u32 %v45, 7
    %v47 = vsub.s32 0, %v46
    %v48 = vrot.slane %v43, %v47
    %v66 = vunpack.c.l.b16 %v22
    %v67 = vunpack.c.l.b16 %v23
    %v68 = vunpack.c.l.b16 %v24
    %v69 = vunpack.c.l.b16 %v25
    %v70 = vunpack.c.l.b16 %v26
    %v71 = vunpack.c.l.b16 %v27
    %v72 = vunpack.c.l.b16 %v28
    %v73 = vunpack.c.l.b16 %v29
    %v74 = vunpack.c.l.b16 %v30
    %v75 = vunpack.c.l.b16 %v31
    %v76 = vunpack.c.l.b16 %v32
    %v77 = vunpack.c.l.b16 %v33
    %v78 = vunpack.c.l.b16 %v34
    %v79 = vunpack.c.l.b16 %v35
    %v80 = vunpack.c.l.b16 %v36
    %v81 = vunpack.c.l.b16 %v37
    %v82 = vpack.c.b16 %v67, %v66
    %v83 = vpack.c.b16 %v69, %v68
    %v84 = vpack.c.b16 %v71, %v70
    %v85 = vpack.c.b16 %v73, %v72
    %v86 = vpack.c.b16 %v75, %v74
    %v87 = vpack.c.b16 %v77, %v76
    %v88 = vpack.c.b16 %v79, %v78
    %v89 = vpack.c.b16 %v81, %v80
    %v95 = vunpack.c.l.b16 %v38
    %v96 = vunpack.c.l.b16 %v39
    %v97 = vunpack.c.l.b16 %v40
    %v98 = vunpack.c.l.b16 %v41
    %v99 = vunpack.c.l.b16 %v42
    %v100 = vpack.c.b16 %v96, %v95
    %v101 = vpack.c.b16 %v98, %v97
    %v102 = vpack.c.b16 %v99, %v99
    %vm105 = vcmask 293888
    %v107 = vsel %vm105, %v82, 0
    %v110 = vsel %vm105, %v83, 0
    %v113 = vsel %vm105, %v84, 0
    %v116 = vsel %vm105, %v85, 0
    %v119 = vsel %vm105, %v86, 0
    %v122 = vsel %vm105, %v87, 0
    %v125 = vsel %vm105, %v88, 0
    %v128 = vsel %vm105, %v89, 0
    %vm130 = vcmask 1041408
    %v132 = vsel %vm130, %v102, 0
    %134 = vmatprep.subr.bf16.mxu0 0
    %135 = vmatpush1.bf16.msra.mxu0 0
    %136 = vmatprep.subr.bf16.mxu0 0
    %137 = vmatpush1.bf16.msra.mxu0 0
    %138 = vmatprep.subr.bf16.mxu0 0
    %139 = vmatpush1.bf16.msra.mxu0 0
    %140 = vmatprep.subr.bf16.mxu0 0
    %141 = vmatpush1.bf16.msra.mxu0 0
    %142 = vmatprep.subr.bf16.mxu0 0
    %143 = vmatpush1.bf16.msra.mxu0 0
    %144 = vmatprep.subr.bf16.mxu0 0
    %145 = vmatpush1.bf16.msra.mxu0 %v132
    %146 = vmatprep.subr.bf16.mxu0 0
    %147 = vmatpush1.bf16.msra.mxu0 %v101
    %148 = vmatprep.subr.bf16.mxu0 0
    %149 = vmatpush1.bf16.msra.mxu0 %v100
    %150 = vmatprep.subr.bf16.mxu0 0
    %151 = vmatpush2.bf16.msra.mxu0 0
    %152 = vmatprep.subr.bf16.mxu0 0
    %153 = vmatpush2.bf16.msra.mxu0 0
    %154 = vmatprep.subr.bf16.mxu0 0
    %155 = vmatpush2.bf16.msra.mxu0 0
    %156 = vmatprep.subr.bf16.mxu0 0
    %157 = vmatpush2.bf16.msra.mxu0 0
    %158 = vmatprep.subr.bf16.mxu0 0
    %159 = vmatpush2.bf16.msra.mxu0 0
    %160 = vmatprep.subr.bf16.mxu0 0
    %161 = vmatpush2.bf16.msra.mxu0 0
    %162 = vmatprep.subr.bf16.mxu0 0
    %163 = vmatpush2.bf16.msra.mxu0 0
    %164 = vmatprep.subr.bf16.mxu0 0
    %165 = vmatpush2.bf16.msra.mxu0 0
    %166 = vmatprep.mubr.bf16.mxu0 0
    %167 = vmatmul.mubr.bf16.gmra.mxu0 %v107
    %v168 = vpop.f32.mrf.mxu0
    %v169 = vadd.f32 %v48, %v168
    %v170 = vpop.f32.mrf.mxu0
    %v171 = vpop.f32.mrf.mxu0
    %v172 = vadd.f32 %v48, %v171
    %v173 = vpop.f32.mrf.mxu0
    %174 = vmatprep.mubr.bf16.mxu0 0
    %175 = vmatmul.mubr.bf16.gmra.mxu0 %v110
    %v176 = vpop.f32.mrf.mxu0
    %v177 = vadd.f32 %v48, %v176
    %v178 = vpop.f32.mrf.mxu0
    %v179 = vpop.f32.mrf.mxu0
    %v180 = vadd.f32 %v48, %v179
    %v181 = vpop.f32.mrf.mxu0
    %182 = vmatprep.mubr.bf16.mxu0 0
    %183 = vmatmul.mubr.bf16.gmra.mxu0 %v113
    %v184 = vpop.f32.mrf.mxu0
    %v185 = vadd.f32 %v48, %v184
    %v186 = vpop.f32.mrf.mxu0
    %v187 = vpop.f32.mrf.mxu0
    %v188 = vadd.f32 %v48, %v187
    %v189 = vpop.f32.mrf.mxu0
    %190 = vmatprep.mubr.bf16.mxu0 0
    %191 = vmatmul.mubr.bf16.gmra.mxu0 %v116
    %v192 = vpop.f32.mrf.mxu0
    %v193 = vadd.f32 %v48, %v192
    %v194 = vpop.f32.mrf.mxu0
    %v195 = vpop.f32.mrf.mxu0
    %v196 = vadd.f32 %v48, %v195
    %v197 = vpop.f32.mrf.mxu0
    %198 = vmatprep.mubr.bf16.mxu0 0
    %199 = vmatmul.mubr.bf16.gmra.mxu0 %v119
    %v200 = vpop.f32.mrf.mxu0
    %v201 = vadd.f32 %v48, %v200
    %v202 = vpop.f32.mrf.mxu0
    %v203 = vpop.f32.mrf.mxu0
    %v204 = vadd.f32 %v48, %v203
    %v205 = vpop.f32.mrf.mxu0
    %206 = vmatprep.mubr.bf16.mxu0 0
    %207 = vmatmul.mubr.bf16.gmra.mxu0 %v122
    %v208 = vpop.f32.mrf.mxu0
    %v209 = vadd.f32 %v48, %v208
    %v210 = vpop.f32.mrf.mxu0
    %v211 = vpop.f32.mrf.mxu0
    %v212 = vadd.f32 %v48, %v211
    %v213 = vpop.f32.mrf.mxu0
    %214 = vmatprep.mubr.bf16.mxu0 0
    %215 = vmatmul.mubr.bf16.gmra.mxu0 %v125
    %v216 = vpop.f32.mrf.mxu0
    %v217 = vadd.f32 %v48, %v216
    %v218 = vpop.f32.mrf.mxu0
    %v219 = vpop.f32.mrf.mxu0
    %v220 = vadd.f32 %v48, %v219
    %v221 = vpop.f32.mrf.mxu0
    %222 = vmatprep.mubr.bf16.mxu0 0
    %223 = vmatmul.mubr.bf16.gmra.mxu0 %v128
    %v224 = vpop.f32.mrf.mxu0
    %v225 = vadd.f32 %v48, %v224
    %v226 = vpop.f32.mrf.mxu0
    %v227 = vpop.f32.mrf.mxu0
    %v228 = vadd.f32 %v48, %v227
    %v229 = vpop.f32.mrf.mxu0
    %230 = vdwg.mxu0
    %v231 = vmax.f32 %v169, 0.0
    %v232 = vmax.f32 %v172, 0.0
    %v233 = vmax.f32 %v177, 0.0
    %v234 = vmax.f32 %v180, 0.0
    %v235 = vmax.f32 %v185, 0.0
    %v236 = vmax.f32 %v188, 0.0
    %v237 = vmax.f32 %v193, 0.0
    %v238 = vmax.f32 %v196, 0.0
    %v239 = vmax.f32 %v201, 0.0
    %v240 = vmax.f32 %v204, 0.0
    %v241 = vmax.f32 %v209, 0.0
    %v242 = vmax.f32 %v212, 0.0
    %v243 = vmax.f32 %v217, 0.0
    %v244 = vmax.f32 %v220, 0.0
    %v245 = vmax.f32 %v225, 0.0
    %v246 = vmax.f32 %v228, 0.0
    %v247 = vadd.f32 %v231, %v232
    %v248 = vadd.f32 %v247, %v233
    %v249 = vadd.f32 %v248, %v234
    %v250 = vadd.f32 %v249, %v235
    %v251 = vadd.f32 %v250, %v236
    %v252 = vadd.f32 %v251, %v237
    %v253 = vadd.f32 %v252, %v238
    %v254 = vadd.f32 %v253, %v239
    %v255 = vadd.f32 %v254, %v240
    %v256 = vadd.f32 %v255, %v241
    %v257 = vadd.f32 %v256, %v242
    %v258 = vadd.f32 %v257, %v243
    %v259 = vadd.f32 %v258, %v244
    %v260 = vadd.f32 %v259, %v245
    %v261 = vadd.f32 %v260, %v246
    %v262 = vrot.slane %v261, 4
    %v263 = vadd.f32 %v261, %v262
    %v264 = vrot.slane %v263, 2
    %v265 = vadd.f32 %v263, %v264
    %v266 = vrot.slane %v265, 1
    %v267 = vadd.f32 %v265, %v266
    %v268 = vrcp.pop 128.0
    %v269 = vmul.f32 %v267, %v268
    %v270 = vsub.f32 %v231, %v269
    %v271 = vsub.f32 %v232, %v269
    %v272 = vsub.f32 %v233, %v269
    %v273 = vsub.f32 %v234, %v269
    %v274 = vsub.f32 %v235, %v269
    %v275 = vsub.f32 %v236, %v269
    %v276 = vsub.f32 %v237, %v269
    %v277 = vsub.f32 %v238, %v269
    %v278 = vsub.f32 %v239, %v269
    %v279 = vsub.f32 %v240, %v269
    %v280 = vsub.f32 %v241, %v269
    %v281 = vsub.f32 %v242, %v269
    %v282 = vsub.f32 %v243, %v269
    %v283 = vsub.f32 %v244, %v269
    %v284 = vsub.f32 %v245, %v269
    %v285 = vsub.f32 %v246, %v269
    %v286 = vmul.f32 %v270, %v270
    %v287 = vmul.f32 %v271, %v271
    %v288 = vmul.f32 %v272, %v272
    %v289 = vmul.f32 %v273, %v273
    %v290 = vmul.f32 %v274, %v274
    %v291 = vmul.f32 %v275, %v275
    %v292 = vmul.f32 %v276, %v276
    %v293 = vmul.f32 %v277, %v277
    %v294 = vmul.f32 %v278, %v278
    %v295 = vmul.f32 %v279, %v279
    %v296 = vmul.f32 %v280, %v280
    %v297 = vmul.f32 %v281, %v281
    %v298 = vmul.f32 %v282, %v282
    %v299 = vmul.f32 %v283, %v283
    %v300 = vmul.f32 %v284, %v284
    %v301 = vmul.f32 %v285, %v285
    %v302 = vadd.f32 %v286, %v287
    %v303 = vadd.f32 %v302, %v288
    %v304 = vadd.f32 %v303, %v289
    %v305 = vadd.f32 %v304, %v290
    %v306 = vadd.f32 %v305, %v291
    %v307 = vadd.f32 %v306, %v292
    %v308 = vadd.f32 %v307, %v293
    %v309 = vadd.f32 %v308, %v294
    %v310 = vadd.f32 %v309, %v295
    %v311 = vadd.f32 %v310, %v296
    %v312 = vadd.f32 %v311, %v297
    %v313 = vadd.f32 %v312, %v298
    %v314 = vadd.f32 %v313, %v299
    %v315 = vadd.f32 %v314, %v300
    %v316 = vadd.f32 %v315, %v301
    %v317 = vrot.slane %v316, 4
    %v318 = vadd.f32 %v316, %v317
    %v319 = vrot.slane %v318, 2
    %v320 = vadd.f32 %v318, %v319
    %v321 = vrot.slane %v320, 1
    %v322 = vadd.f32 %v320, %v321
    %v323 = vmul.f32 %v322, %v268
    %v324 = vadd.f32 %v323, 1e-05
    %v325 = vrsqrt.pop %v324
    %v326 = vmul.f32 %v270, %v325
    %v327 = vmul.f32 %v271, %v325
    %v328 = vmul.f32 %v272, %v325
    %v329 = vmul.f32 %v273, %v325
    %v330 = vmul.f32 %v274, %v325
    %v331 = vmul.f32 %v275, %v325
    %v332 = vmul.f32 %v276, %v325
    %v333 = vmul.f32 %v277, %v325
    %v334 = vmul.f32 %v278, %v325
    %v335 = vmul.f32 %v279, %v325
    %v336 = vmul.f32 %v280, %v325
    %v337 = vmul.f32 %v281, %v325
    %v338 = vmul.f32 %v282, %v325
    %v339 = vmul.f32 %v283, %v325
    %v340 = vmul.f32 %v284, %v325
    %v341 = vmul.f32 %v285, %v325
    %v342 = vld [vmem:[%s3] sm:$0x1]
    %v344 = vlaneseq
    %v345 = vshrl.u32 %v344, 7
    %v346 = vsub.s32 0, %v345
    %v347 = vrot.slane %v342, %v346
    %v349 = vmul.f32 %v326, %v347
    %v350 = vmul.f32 %v327, %v347
    %v351 = vmul.f32 %v328, %v347
    %v352 = vmul.f32 %v329, %v347
    %v353 = vmul.f32 %v330, %v347
    %v354 = vmul.f32 %v331, %v347
    %v355 = vmul.f32 %v332, %v347
    %v356 = vmul.f32 %v333, %v347
    %v357 = vmul.f32 %v334, %v347
    %v358 = vmul.f32 %v335, %v347
    %v359 = vmul.f32 %v336, %v347
    %v360 = vmul.f32 %v337, %v347
    %v361 = vmul.f32 %v338, %v347
    %v362 = vmul.f32 %v339, %v347
    %v363 = vmul.f32 %v340, %v347
    %v364 = vmul.f32 %v341, %v347
    %v365 = vld [vmem:[%s4] sm:$0x1]
    %v367 = vlaneseq
    %v368 = vshrl.u32 %v367, 7
    %v369 = vsub.s32 0, %v368
    %v370 = vrot.slane %v365, %v369
    %v372 = vadd.f32 %v349, %v370
    %v373 = vadd.f32 %v350, %v370
    %v374 = vadd.f32 %v351, %v370
    %v375 = vadd.f32 %v352, %v370
    %v376 = vadd.f32 %v353, %v370
    %v377 = vadd.f32 %v354, %v370
    %v378 = vadd.f32 %v355, %v370
    %v379 = vadd.f32 %v356, %v370
    %v380 = vadd.f32 %v357, %v370
    %v381 = vadd.f32 %v358, %v370
    %v382 = vadd.f32 %v359, %v370
    %v383 = vadd.f32 %v360, %v370
    %v384 = vadd.f32 %v361, %v370
    %v385 = vadd.f32 %v362, %v370
    %v386 = vadd.f32 %v363, %v370
    %v387 = vadd.f32 %v364, %v370
    %388 = vst [vmem:[#allocation2] sm:$0xff] %v372
    %389 = vst [vmem:[#allocation2 + $0x8] sm:$0xff] %v373
    %390 = vst [vmem:[#allocation2 + $0x10] sm:$0xff] %v374
    %391 = vst [vmem:[#allocation2 + $0x18] sm:$0xff] %v375
    %392 = vst [vmem:[#allocation2 + $0x20] sm:$0xff] %v376
    %393 = vst [vmem:[#allocation2 + $0x28] sm:$0xff] %v377
    %394 = vst [vmem:[#allocation2 + $0x30] sm:$0xff] %v378
    %395 = vst [vmem:[#allocation2 + $0x38] sm:$0xff] %v379
    %396 = vst [vmem:[#allocation2 + $0x40] sm:$0xff] %v380
    %397 = vst [vmem:[#allocation2 + $0x48] sm:$0xff] %v381
    %398 = vst [vmem:[#allocation2 + $0x50] sm:$0xff] %v382
    %399 = vst [vmem:[#allocation2 + $0x58] sm:$0xff] %v383
    %400 = vst [vmem:[#allocation2 + $0x60] sm:$0xff] %v384
    %401 = vst [vmem:[#allocation2 + $0x68] sm:$0xff] %v385
    %402 = vst [vmem:[#allocation2 + $0x70] sm:$0xff] %v386
    %403 = vst [vmem:[#allocation2 + $0x78] sm:$0xff] %v387
    // Predicated region
    $region22: #{tpu_custom_call.1} parent=1 // pred_check
      _
    $region23: #{tpu_custom_call.1} parent=1 // pred_check_branch
      %405 = sbr.rel (0) target = $region25
    $region24: #{tpu_custom_call.1} parent=1 // pred_region
      %s407 = ssub.s32 2048, 2048
      %408 = vsyncadd [#allocation3], %s407
      %s409 = sshll.u32 [#allocation2], 4
      %s410 = int_to_ptr.vmem [resolvable:$true] %s409
      %415 = dma.vmem_to_hbm [thread:$0]  %s410, 2048, %s5, [#allocation3], 128, 128, 8
    $region25: #{tpu_custom_call.1} parent=1 // pred_fallthru
      _
    // Predicated region
    $region26: #{tpu_custom_call.1} parent=1 // pred_check
      _
    $region27: #{tpu_custom_call.1} parent=1 // pred_check_branch
      %417 = sbr.rel (0) target = $region29
    $region28: #{tpu_custom_call.1} parent=1 // pred_region
      %418 = dma.done [#allocation3], 2048
    $region29: #{tpu_custom_call.1} parent=1 // pred_fallthru
      _
    %419 = vsyncpa [#allocation3], 1

</llo_original>
